<compile_context>
chip_gen: v5e
topology: v5e:2x2
jax: 0.10.0
libtpu: 0.0.40
codegen_flags: <defaults>
</compile_context>

<pallas_src>
import functools

import jax
import jax.numpy as jnp
from jax.experimental import pallas as pl
from jax.experimental.pallas import tpu as pltpu


# ------------- fused embedding-gather + LSTMCell + lm_head + log_softmax ----
def _fused_kernel(ids_ref,                      # scalar-prefetch: (N_pad,) int32 in SMEM
                  wte_hbm,                      # (V, E) f32, HBM (pl.ANY)
                  wih_t_ref,                    # (E, 4E) bf16
                  b_ref,                        # (1, 4E) f32  (b_ih + b_hh)
                  wlm_t_ref,                    # (E, V) bf16
                  blm_ref,                      # (1, V) f32
                  scores_ref,                   # (N_pad, V) f32
                  h1_ref,                       # (N_pad, E) f32
                  c1_ref,                       # (N_pad, E) f32
                  x_vmem,                       # scratch (N_pad, E) f32
                  sem,                          # scratch DMA sems (N_pad,)
                  *, edim, n_pad):
    # ---- in-kernel embedding gather: N_pad concurrent row DMAs HBM -> VMEM ----
    copies = []
    for r in range(n_pad):
        cp = pltpu.make_async_copy(
            wte_hbm.at[pl.ds(ids_ref[r], 1), :],
            x_vmem.at[pl.ds(r, 1), :],
            sem.at[r],
        )
        cp.start()
        copies.append(cp)
    for cp in copies:
        cp.wait()

    x = x_vmem[...]                                           # (N_pad, E) f32

    # ---- LSTMCell with h0 = c0 = 0 (hidden_state=None) ----
    # gates = x @ W_ih^T + (b_ih + b_hh); PyTorch gate order [i, f, g, o].
    gates = (jnp.dot(x.astype(wih_t_ref.dtype), wih_t_ref[...],
                     preferred_element_type=jnp.float32)
             + b_ref[...])                                    # (N_pad, 4E) f32

    i_g = jax.nn.sigmoid(gates[:, 0 * edim:1 * edim])
    # f-gate skipped: it multiplies c0 == 0.
    g_g = jnp.tanh(gates[:, 2 * edim:3 * edim])
    o_g = jax.nn.sigmoid(gates[:, 3 * edim:4 * edim])

    c1 = i_g * g_g                                            # f*c0 + i*g, c0 = 0
    h1 = o_g * jnp.tanh(c1)
    h1_ref[...] = h1
    c1_ref[...] = c1

    # ---- lm_head + log_softmax over vocab (f32) ----
    logits = (jnp.dot(h1.astype(wlm_t_ref.dtype), wlm_t_ref[...],
                      preferred_element_type=jnp.float32)
              + blm_ref[...])                                 # (N_pad, V)
    m = jnp.max(logits, axis=1, keepdims=True)
    shifted = logits - m
    lse = jnp.log(jnp.sum(jnp.exp(shifted), axis=1, keepdims=True))
    scores_ref[...] = shifted - lse


# --------------------------------- wrapper ----------------------------------
def simple_lstm_cell_forward(sentence, params, hidden_state=None):
    b, t = sentence.shape
    assert t == 1, "PyTorch SimpleLSTMCell only type-checks for seqlen == 1"
    # TODO(synk): nonzero hidden_state path (concat [x, h0] with stacked
    # [W_ih; W_hh]) not implemented; the module's default call uses None.
    assert hidden_state is None

    wte = params["wte"]
    v, e = wte.shape
    n = b * t
    n_pad = max(8, ((n + 7) // 8) * 8)        # full (8,128) sublane tiles

    ids = sentence.reshape(n).astype(jnp.int32)
    ids_pad = jnp.zeros((n_pad,), jnp.int32).at[:n].set(ids)

    # Pre-transpose weights (transpose-free kernel); bf16 weights, f32 accumulate.
    wih_t = params["w_ih"].T.astype(jnp.bfloat16)                     # (E, 4E)
    bias = (params["b_ih"] + params["b_hh"]).reshape(1, 4 * e).astype(jnp.float32)
    wlm_t = params["lm_w"].T.astype(jnp.bfloat16)                     # (E, V)
    blm = params["lm_b"].reshape(1, v).astype(jnp.float32)
    # params["w_hh"] intentionally unused: h0 == 0.

    kernel = functools.partial(_fused_kernel, edim=e, n_pad=n_pad)
    scores, h1, c1 = pl.pallas_call(
        kernel,
        out_shape=(
            jax.ShapeDtypeStruct((n_pad, v), jnp.float32),   # lm_scores (padded)
            jax.ShapeDtypeStruct((n_pad, e), jnp.float32),   # lstm_out  (h1)
            jax.ShapeDtypeStruct((n_pad, e), jnp.float32),   # lstm_hidden (c1)
        ),
        grid_spec=pltpu.PrefetchScalarGridSpec(
            num_scalar_prefetch=1,            # token ids land in SMEM
            grid=(1,),
            in_specs=[
                pl.BlockSpec(memory_space=pl.ANY),                  # wte stays in HBM
                pl.BlockSpec((e, 4 * e), lambda i, ids: (0, 0)),    # wih_t
                pl.BlockSpec((1, 4 * e), lambda i, ids: (0, 0)),    # bias
                pl.BlockSpec((e, v), lambda i, ids: (0, 0)),        # wlm_t
                pl.BlockSpec((1, v), lambda i, ids: (0, 0)),        # blm
            ],
            out_specs=(
                pl.BlockSpec((n_pad, v), lambda i, ids: (0, 0)),
                pl.BlockSpec((n_pad, e), lambda i, ids: (0, 0)),
                pl.BlockSpec((n_pad, e), lambda i, ids: (0, 0)),
            ),
            scratch_shapes=[
                pltpu.VMEM((n_pad, e), jnp.float32),     # gathered embeddings
                pltpu.SemaphoreType.DMA((n_pad,)),       # one sem per row DMA
            ],
        ),
        compiler_params=pltpu.CompilerParams(
            dimension_semantics=("arbitrary",)),
    )(ids_pad, wte, wih_t, bias, wlm_t, blm)

    return scores[:b], (h1[:n], c1[:n])


# ---------------------------- pure-JAX reference -----------------------------
def _reference_forward(sentence, params):
    b, t = sentence.shape
    n = b * t
    x = params["wte"][sentence.reshape(n)]                           # (N, E)
    e = x.shape[1]
    gates = x @ params["w_ih"].T + params["b_ih"] + params["b_hh"]   # h0 = 0
    i_g = jax.nn.sigmoid(gates[:, 0 * e:1 * e])
    g_g = jnp.tanh(gates[:, 2 * e:3 * e])
    o_g = jax.nn.sigmoid(gates[:, 3 * e:4 * e])
    c1 = i_g * g_g
    h1 = o_g * jnp.tanh(c1)
    logits = h1.reshape(b, -1) @ params["lm_w"].T + params["lm_b"]
    scores = jax.nn.log_softmax(logits, axis=1)
    return scores, (h1, c1)


if __name__ == "__main__":
    vocab_size, edim = 256, 128
    batch, seqlen = 4, 1

    key = jax.random.PRNGKey(0)
    k = jax.random.split(key, 8)
    bound = 1.0 / (edim ** 0.5)
    params = {
        # nn.Embedding default init ~ N(0, 1)
        "wte": jax.random.normal(k[0], (vocab_size, edim), jnp.float32),
        # LSTMCell: weight_ih (4E, E), weight_hh (4E, E), biases (4E,)
        "w_ih": jax.random.uniform(k[1], (4 * edim, edim), jnp.float32, -bound, bound),
        "w_hh": jax.random.uniform(k[2], (4 * edim, edim), jnp.float32, -bound, bound),
        "b_ih": jax.random.uniform(k[3], (4 * edim,), jnp.float32, -bound, bound),
        "b_hh": jax.random.uniform(k[4], (4 * edim,), jnp.float32, -bound, bound),
        # lm_head: Linear(edim, vocab) -> weight (V, E), bias (V,)
        "lm_w": jax.random.uniform(k[5], (vocab_size, edim), jnp.float32, -bound, bound),
        "lm_b": jax.random.uniform(k[6], (vocab_size,), jnp.float32, -bound, bound),
    }

    sentence = jax.random.randint(k[7], (batch, seqlen), 0, vocab_size, jnp.int32)

    lm_scores, (lstm_out, lstm_hidden) = simple_lstm_cell_forward(sentence, params)
    jax.block_until_ready((lm_scores, lstm_out, lstm_hidden))

    assert lm_scores.shape == (batch, vocab_size)
    assert lstm_out.shape == (batch * seqlen, edim)
    assert lstm_hidden.shape == (batch * seqlen, edim)

    # loose tolerance: bf16 matmul weights with f32 accumulation
    ref_scores, (ref_h1, ref_c1) = _reference_forward(sentence, params)
    assert jnp.max(jnp.abs(lm_scores - ref_scores)) < 1e-1
    assert jnp.max(jnp.abs(lstm_out - ref_h1)) < 1e-1
    assert jnp.max(jnp.abs(lstm_hidden - ref_c1)) < 1e-1

    print("KERNEL_OK")
</pallas_src>

<mosaic_0001>
module attributes {stable_mosaic.version = 11 : i64} {
  func.func @_fused_kernel(%arg0: i32, %arg1: memref<8xi32, #tpu.memory_space<smem>>, %arg2: memref<256x128xf32, #tpu.memory_space<any>>, %arg3: memref<128x512xbf16, #tpu.memory_space<vmem>>, %arg4: memref<1x512xf32, #tpu.memory_space<vmem>>, %arg5: memref<128x256xbf16, #tpu.memory_space<vmem>>, %arg6: memref<1x256xf32, #tpu.memory_space<vmem>>, %arg7: memref<8x256xf32, #tpu.memory_space<vmem>>, %arg8: memref<8x128xf32, #tpu.memory_space<vmem>>, %arg9: memref<8x128xf32, #tpu.memory_space<vmem>>, %arg10: memref<8x128xf32, #tpu.memory_space<vmem>>, %arg11: memref<8x!tpu.dma_semaphore, #tpu.memory_space<semaphore_mem>>) attributes {dimension_semantics = [#tpu.dimension_semantics<arbitrary>], iteration_bounds = array<i64: 1>, scalar_prefetch = 1 : i64, scratch_operands = 2 : i64, tpu.core_type = #tpu.core_type<tc>, window_params = [{}, {pipeline_mode = #tpu.pipeline_mode<synchronous>, transform_indices = @transform_1, window_bounds = array<i64: 128, 512>}, {pipeline_mode = #tpu.pipeline_mode<synchronous>, transform_indices = @transform_2, window_bounds = array<i64: 1, 512>}, {pipeline_mode = #tpu.pipeline_mode<synchronous>, transform_indices = @transform_3, window_bounds = array<i64: 128, 256>}, {pipeline_mode = #tpu.pipeline_mode<synchronous>, transform_indices = @transform_4, window_bounds = array<i64: 1, 256>}, {pipeline_mode = #tpu.pipeline_mode<synchronous>, transform_indices = @transform_5, window_bounds = array<i64: 8, 256>}, {pipeline_mode = #tpu.pipeline_mode<synchronous>, transform_indices = @transform_6, window_bounds = array<i64: 8, 128>}, {pipeline_mode = #tpu.pipeline_mode<synchronous>, transform_indices = @transform_7, window_bounds = array<i64: 8, 128>}]} {
    %c0 = arith.constant 0 : index
    %0 = memref.load %arg1[%c0] : memref<8xi32, #tpu.memory_space<smem>>
    %c0_i32 = arith.constant 0 : i32
    %c0_i32_0 = arith.constant 0 : i32
    %1 = tpu.memref_slice %arg2[%0, %c0_i32_0] : memref<256x128xf32, #tpu.memory_space<any>> -> memref<1x128xf32, #tpu.memory_space<any>>
    %c0_i32_1 = arith.constant 0 : i32
    %c0_i32_2 = arith.constant 0 : i32
    %2 = tpu.memref_slice %arg10[%c0_i32_1, %c0_i32_2] : memref<8x128xf32, #tpu.memory_space<vmem>> -> memref<1x128xf32, #tpu.memory_space<vmem>>
    %3 = tpu.memref_slice %arg11[%c0_i32] : memref<8x!tpu.dma_semaphore, #tpu.memory_space<semaphore_mem>> -> memref<1x!tpu.dma_semaphore, #tpu.memory_space<semaphore_mem>>
    %4 = tpu.memref_squeeze %3 : memref<1x!tpu.dma_semaphore, #tpu.memory_space<semaphore_mem>> -> memref<!tpu.dma_semaphore, #tpu.memory_space<semaphore_mem>>
    tpu.enqueue_dma source(%1 : memref<1x128xf32, #tpu.memory_space<any>>) target(%2 : memref<1x128xf32, #tpu.memory_space<vmem>>) target_semaphore(%4 : memref<!tpu.dma_semaphore, #tpu.memory_space<semaphore_mem>>)
    %c1 = arith.constant 1 : index
    %5 = memref.load %arg1[%c1] : memref<8xi32, #tpu.memory_space<smem>>
    %c1_i32 = arith.constant 1 : i32
    %c0_i32_3 = arith.constant 0 : i32
    %6 = tpu.memref_slice %arg2[%5, %c0_i32_3] : memref<256x128xf32, #tpu.memory_space<any>> -> memref<1x128xf32, #tpu.memory_space<any>>
    %c1_i32_4 = arith.constant 1 : i32
    %c0_i32_5 = arith.constant 0 : i32
    %7 = tpu.memref_slice %arg10[%c1_i32_4, %c0_i32_5] : memref<8x128xf32, #tpu.memory_space<vmem>> -> memref<1x128xf32, #tpu.memory_space<vmem>>
    %8 = tpu.memref_slice %arg11[%c1_i32] : memref<8x!tpu.dma_semaphore, #tpu.memory_space<semaphore_mem>> -> memref<1x!tpu.dma_semaphore, #tpu.memory_space<semaphore_mem>>
    %9 = tpu.memref_squeeze %8 : memref<1x!tpu.dma_semaphore, #tpu.memory_space<semaphore_mem>> -> memref<!tpu.dma_semaphore, #tpu.memory_space<semaphore_mem>>
    tpu.enqueue_dma source(%6 : memref<1x128xf32, #tpu.memory_space<any>>) target(%7 : memref<1x128xf32, #tpu.memory_space<vmem>>) target_semaphore(%9 : memref<!tpu.dma_semaphore, #tpu.memory_space<semaphore_mem>>)
    %c2 = arith.constant 2 : index
    %10 = memref.load %arg1[%c2] : memref<8xi32, #tpu.memory_space<smem>>
    %c2_i32 = arith.constant 2 : i32
    %c0_i32_6 = arith.constant 0 : i32
    %11 = tpu.memref_slice %arg2[%10, %c0_i32_6] : memref<256x128xf32, #tpu.memory_space<any>> -> memref<1x128xf32, #tpu.memory_space<any>>
    %c2_i32_7 = arith.constant 2 : i32
    %c0_i32_8 = arith.constant 0 : i32
    %12 = tpu.memref_slice %arg10[%c2_i32_7, %c0_i32_8] : memref<8x128xf32, #tpu.memory_space<vmem>> -> memref<1x128xf32, #tpu.memory_space<vmem>>
    %13 = tpu.memref_slice %arg11[%c2_i32] : memref<8x!tpu.dma_semaphore, #tpu.memory_space<semaphore_mem>> -> memref<1x!tpu.dma_semaphore, #tpu.memory_space<semaphore_mem>>
    %14 = tpu.memref_squeeze %13 : memref<1x!tpu.dma_semaphore, #tpu.memory_space<semaphore_mem>> -> memref<!tpu.dma_semaphore, #tpu.memory_space<semaphore_mem>>
    tpu.enqueue_dma source(%11 : memref<1x128xf32, #tpu.memory_space<any>>) target(%12 : memref<1x128xf32, #tpu.memory_space<vmem>>) target_semaphore(%14 : memref<!tpu.dma_semaphore, #tpu.memory_space<semaphore_mem>>)
    %c3 = arith.constant 3 : index
    %15 = memref.load %arg1[%c3] : memref<8xi32, #tpu.memory_space<smem>>
    %c3_i32 = arith.constant 3 : i32
    %c0_i32_9 = arith.constant 0 : i32
    %16 = tpu.memref_slice %arg2[%15, %c0_i32_9] : memref<256x128xf32, #tpu.memory_space<any>> -> memref<1x128xf32, #tpu.memory_space<any>>
    %c3_i32_10 = arith.constant 3 : i32
    %c0_i32_11 = arith.constant 0 : i32
    %17 = tpu.memref_slice %arg10[%c3_i32_10, %c0_i32_11] : memref<8x128xf32, #tpu.memory_space<vmem>> -> memref<1x128xf32, #tpu.memory_space<vmem>>
    %18 = tpu.memref_slice %arg11[%c3_i32] : memref<8x!tpu.dma_semaphore, #tpu.memory_space<semaphore_mem>> -> memref<1x!tpu.dma_semaphore, #tpu.memory_space<semaphore_mem>>
    %19 = tpu.memref_squeeze %18 : memref<1x!tpu.dma_semaphore, #tpu.memory_space<semaphore_mem>> -> memref<!tpu.dma_semaphore, #tpu.memory_space<semaphore_mem>>
    tpu.enqueue_dma source(%16 : memref<1x128xf32, #tpu.memory_space<any>>) target(%17 : memref<1x128xf32, #tpu.memory_space<vmem>>) target_semaphore(%19 : memref<!tpu.dma_semaphore, #tpu.memory_space<semaphore_mem>>)
    %c4 = arith.constant 4 : index
    %20 = memref.load %arg1[%c4] : memref<8xi32, #tpu.memory_space<smem>>
    %c4_i32 = arith.constant 4 : i32
    %c0_i32_12 = arith.constant 0 : i32
    %21 = tpu.memref_slice %arg2[%20, %c0_i32_12] : memref<256x128xf32, #tpu.memory_space<any>> -> memref<1x128xf32, #tpu.memory_space<any>>
    %c4_i32_13 = arith.constant 4 : i32
    %c0_i32_14 = arith.constant 0 : i32
    %22 = tpu.memref_slice %arg10[%c4_i32_13, %c0_i32_14] : memref<8x128xf32, #tpu.memory_space<vmem>> -> memref<1x128xf32, #tpu.memory_space<vmem>>
    %23 = tpu.memref_slice %arg11[%c4_i32] : memref<8x!tpu.dma_semaphore, #tpu.memory_space<semaphore_mem>> -> memref<1x!tpu.dma_semaphore, #tpu.memory_space<semaphore_mem>>
    %24 = tpu.memref_squeeze %23 : memref<1x!tpu.dma_semaphore, #tpu.memory_space<semaphore_mem>> -> memref<!tpu.dma_semaphore, #tpu.memory_space<semaphore_mem>>
    tpu.enqueue_dma source(%21 : memref<1x128xf32, #tpu.memory_space<any>>) target(%22 : memref<1x128xf32, #tpu.memory_space<vmem>>) target_semaphore(%24 : memref<!tpu.dma_semaphore, #tpu.memory_space<semaphore_mem>>)
    %c5 = arith.constant 5 : index
    %25 = memref.load %arg1[%c5] : memref<8xi32, #tpu.memory_space<smem>>
    %c5_i32 = arith.constant 5 : i32
    %c0_i32_15 = arith.constant 0 : i32
    %26 = tpu.memref_slice %arg2[%25, %c0_i32_15] : memref<256x128xf32, #tpu.memory_space<any>> -> memref<1x128xf32, #tpu.memory_space<any>>
    %c5_i32_16 = arith.constant 5 : i32
    %c0_i32_17 = arith.constant 0 : i32
    %27 = tpu.memref_slice %arg10[%c5_i32_16, %c0_i32_17] : memref<8x128xf32, #tpu.memory_space<vmem>> -> memref<1x128xf32, #tpu.memory_space<vmem>>
    %28 = tpu.memref_slice %arg11[%c5_i32] : memref<8x!tpu.dma_semaphore, #tpu.memory_space<semaphore_mem>> -> memref<1x!tpu.dma_semaphore, #tpu.memory_space<semaphore_mem>>
    %29 = tpu.memref_squeeze %28 : memref<1x!tpu.dma_semaphore, #tpu.memory_space<semaphore_mem>> -> memref<!tpu.dma_semaphore, #tpu.memory_space<semaphore_mem>>
    tpu.enqueue_dma source(%26 : memref<1x128xf32, #tpu.memory_space<any>>) target(%27 : memref<1x128xf32, #tpu.memory_space<vmem>>) target_semaphore(%29 : memref<!tpu.dma_semaphore, #tpu.memory_space<semaphore_mem>>)
    %c6 = arith.constant 6 : index
    %30 = memref.load %arg1[%c6] : memref<8xi32, #tpu.memory_space<smem>>
    %c6_i32 = arith.constant 6 : i32
    %c0_i32_18 = arith.constant 0 : i32
    %31 = tpu.memref_slice %arg2[%30, %c0_i32_18] : memref<256x128xf32, #tpu.memory_space<any>> -> memref<1x128xf32, #tpu.memory_space<any>>
    %c6_i32_19 = arith.constant 6 : i32
    %c0_i32_20 = arith.constant 0 : i32
    %32 = tpu.memref_slice %arg10[%c6_i32_19, %c0_i32_20] : memref<8x128xf32, #tpu.memory_space<vmem>> -> memref<1x128xf32, #tpu.memory_space<vmem>>
    %33 = tpu.memref_slice %arg11[%c6_i32] : memref<8x!tpu.dma_semaphore, #tpu.memory_space<semaphore_mem>> -> memref<1x!tpu.dma_semaphore, #tpu.memory_space<semaphore_mem>>
    %34 = tpu.memref_squeeze %33 : memref<1x!tpu.dma_semaphore, #tpu.memory_space<semaphore_mem>> -> memref<!tpu.dma_semaphore, #tpu.memory_space<semaphore_mem>>
    tpu.enqueue_dma source(%31 : memref<1x128xf32, #tpu.memory_space<any>>) target(%32 : memref<1x128xf32, #tpu.memory_space<vmem>>) target_semaphore(%34 : memref<!tpu.dma_semaphore, #tpu.memory_space<semaphore_mem>>)
    %c7 = arith.constant 7 : index
    %35 = memref.load %arg1[%c7] : memref<8xi32, #tpu.memory_space<smem>>
    %c7_i32 = arith.constant 7 : i32
    %c0_i32_21 = arith.constant 0 : i32
    %36 = tpu.memref_slice %arg2[%35, %c0_i32_21] : memref<256x128xf32, #tpu.memory_space<any>> -> memref<1x128xf32, #tpu.memory_space<any>>
    %c7_i32_22 = arith.constant 7 : i32
    %c0_i32_23 = arith.constant 0 : i32
    %37 = tpu.memref_slice %arg10[%c7_i32_22, %c0_i32_23] : memref<8x128xf32, #tpu.memory_space<vmem>> -> memref<1x128xf32, #tpu.memory_space<vmem>>
    %38 = tpu.memref_slice %arg11[%c7_i32] : memref<8x!tpu.dma_semaphore, #tpu.memory_space<semaphore_mem>> -> memref<1x!tpu.dma_semaphore, #tpu.memory_space<semaphore_mem>>
    %39 = tpu.memref_squeeze %38 : memref<1x!tpu.dma_semaphore, #tpu.memory_space<semaphore_mem>> -> memref<!tpu.dma_semaphore, #tpu.memory_space<semaphore_mem>>
    tpu.enqueue_dma source(%36 : memref<1x128xf32, #tpu.memory_space<any>>) target(%37 : memref<1x128xf32, #tpu.memory_space<vmem>>) target_semaphore(%39 : memref<!tpu.dma_semaphore, #tpu.memory_space<semaphore_mem>>)
    %c0_i32_24 = arith.constant 0 : i32
    %c0_i32_25 = arith.constant 0 : i32
    %40 = tpu.memref_slice %arg2[%0, %c0_i32_25] : memref<256x128xf32, #tpu.memory_space<any>> -> memref<1x128xf32, #tpu.memory_space<any>>
    %c0_i32_26 = arith.constant 0 : i32
    %c0_i32_27 = arith.constant 0 : i32
    %41 = tpu.memref_slice %arg10[%c0_i32_26, %c0_i32_27] : memref<8x128xf32, #tpu.memory_space<vmem>> -> memref<1x128xf32, #tpu.memory_space<vmem>>
    %42 = tpu.memref_slice %arg11[%c0_i32_24] : memref<8x!tpu.dma_semaphore, #tpu.memory_space<semaphore_mem>> -> memref<1x!tpu.dma_semaphore, #tpu.memory_space<semaphore_mem>>
    %43 = tpu.memref_squeeze %42 : memref<1x!tpu.dma_semaphore, #tpu.memory_space<semaphore_mem>> -> memref<!tpu.dma_semaphore, #tpu.memory_space<semaphore_mem>>
    tpu.wait_dma2 semaphore(%43 : memref<!tpu.dma_semaphore, #tpu.memory_space<semaphore_mem>>) src(%40 : memref<1x128xf32, #tpu.memory_space<any>>) dst(%41 : memref<1x128xf32, #tpu.memory_space<vmem>>)
    %c1_i32_28 = arith.constant 1 : i32
    %c0_i32_29 = arith.constant 0 : i32
    %44 = tpu.memref_slice %arg2[%5, %c0_i32_29] : memref<256x128xf32, #tpu.memory_space<any>> -> memref<1x128xf32, #tpu.memory_space<any>>
    %c1_i32_30 = arith.constant 1 : i32
    %c0_i32_31 = arith.constant 0 : i32
    %45 = tpu.memref_slice %arg10[%c1_i32_30, %c0_i32_31] : memref<8x128xf32, #tpu.memory_space<vmem>> -> memref<1x128xf32, #tpu.memory_space<vmem>>
    %46 = tpu.memref_slice %arg11[%c1_i32_28] : memref<8x!tpu.dma_semaphore, #tpu.memory_space<semaphore_mem>> -> memref<1x!tpu.dma_semaphore, #tpu.memory_space<semaphore_mem>>
    %47 = tpu.memref_squeeze %46 : memref<1x!tpu.dma_semaphore, #tpu.memory_space<semaphore_mem>> -> memref<!tpu.dma_semaphore, #tpu.memory_space<semaphore_mem>>
    tpu.wait_dma2 semaphore(%47 : memref<!tpu.dma_semaphore, #tpu.memory_space<semaphore_mem>>) src(%44 : memref<1x128xf32, #tpu.memory_space<any>>) dst(%45 : memref<1x128xf32, #tpu.memory_space<vmem>>)
    %c2_i32_32 = arith.constant 2 : i32
    %c0_i32_33 = arith.constant 0 : i32
    %48 = tpu.memref_slice %arg2[%10, %c0_i32_33] : memref<256x128xf32, #tpu.memory_space<any>> -> memref<1x128xf32, #tpu.memory_space<any>>
    %c2_i32_34 = arith.constant 2 : i32
    %c0_i32_35 = arith.constant 0 : i32
    %49 = tpu.memref_slice %arg10[%c2_i32_34, %c0_i32_35] : memref<8x128xf32, #tpu.memory_space<vmem>> -> memref<1x128xf32, #tpu.memory_space<vmem>>
    %50 = tpu.memref_slice %arg11[%c2_i32_32] : memref<8x!tpu.dma_semaphore, #tpu.memory_space<semaphore_mem>> -> memref<1x!tpu.dma_semaphore, #tpu.memory_space<semaphore_mem>>
    %51 = tpu.memref_squeeze %50 : memref<1x!tpu.dma_semaphore, #tpu.memory_space<semaphore_mem>> -> memref<!tpu.dma_semaphore, #tpu.memory_space<semaphore_mem>>
    tpu.wait_dma2 semaphore(%51 : memref<!tpu.dma_semaphore, #tpu.memory_space<semaphore_mem>>) src(%48 : memref<1x128xf32, #tpu.memory_space<any>>) dst(%49 : memref<1x128xf32, #tpu.memory_space<vmem>>)
    %c3_i32_36 = arith.constant 3 : i32
    %c0_i32_37 = arith.constant 0 : i32
    %52 = tpu.memref_slice %arg2[%15, %c0_i32_37] : memref<256x128xf32, #tpu.memory_space<any>> -> memref<1x128xf32, #tpu.memory_space<any>>
    %c3_i32_38 = arith.constant 3 : i32
    %c0_i32_39 = arith.constant 0 : i32
    %53 = tpu.memref_slice %arg10[%c3_i32_38, %c0_i32_39] : memref<8x128xf32, #tpu.memory_space<vmem>> -> memref<1x128xf32, #tpu.memory_space<vmem>>
    %54 = tpu.memref_slice %arg11[%c3_i32_36] : memref<8x!tpu.dma_semaphore, #tpu.memory_space<semaphore_mem>> -> memref<1x!tpu.dma_semaphore, #tpu.memory_space<semaphore_mem>>
    %55 = tpu.memref_squeeze %54 : memref<1x!tpu.dma_semaphore, #tpu.memory_space<semaphore_mem>> -> memref<!tpu.dma_semaphore, #tpu.memory_space<semaphore_mem>>
    tpu.wait_dma2 semaphore(%55 : memref<!tpu.dma_semaphore, #tpu.memory_space<semaphore_mem>>) src(%52 : memref<1x128xf32, #tpu.memory_space<any>>) dst(%53 : memref<1x128xf32, #tpu.memory_space<vmem>>)
    %c4_i32_40 = arith.constant 4 : i32
    %c0_i32_41 = arith.constant 0 : i32
    %56 = tpu.memref_slice %arg2[%20, %c0_i32_41] : memref<256x128xf32, #tpu.memory_space<any>> -> memref<1x128xf32, #tpu.memory_space<any>>
    %c4_i32_42 = arith.constant 4 : i32
    %c0_i32_43 = arith.constant 0 : i32
    %57 = tpu.memref_slice %arg10[%c4_i32_42, %c0_i32_43] : memref<8x128xf32, #tpu.memory_space<vmem>> -> memref<1x128xf32, #tpu.memory_space<vmem>>
    %58 = tpu.memref_slice %arg11[%c4_i32_40] : memref<8x!tpu.dma_semaphore, #tpu.memory_space<semaphore_mem>> -> memref<1x!tpu.dma_semaphore, #tpu.memory_space<semaphore_mem>>
    %59 = tpu.memref_squeeze %58 : memref<1x!tpu.dma_semaphore, #tpu.memory_space<semaphore_mem>> -> memref<!tpu.dma_semaphore, #tpu.memory_space<semaphore_mem>>
    tpu.wait_dma2 semaphore(%59 : memref<!tpu.dma_semaphore, #tpu.memory_space<semaphore_mem>>) src(%56 : memref<1x128xf32, #tpu.memory_space<any>>) dst(%57 : memref<1x128xf32, #tpu.memory_space<vmem>>)
    %c5_i32_44 = arith.constant 5 : i32
    %c0_i32_45 = arith.constant 0 : i32
    %60 = tpu.memref_slice %arg2[%25, %c0_i32_45] : memref<256x128xf32, #tpu.memory_space<any>> -> memref<1x128xf32, #tpu.memory_space<any>>
    %c5_i32_46 = arith.constant 5 : i32
    %c0_i32_47 = arith.constant 0 : i32
    %61 = tpu.memref_slice %arg10[%c5_i32_46, %c0_i32_47] : memref<8x128xf32, #tpu.memory_space<vmem>> -> memref<1x128xf32, #tpu.memory_space<vmem>>
    %62 = tpu.memref_slice %arg11[%c5_i32_44] : memref<8x!tpu.dma_semaphore, #tpu.memory_space<semaphore_mem>> -> memref<1x!tpu.dma_semaphore, #tpu.memory_space<semaphore_mem>>
    %63 = tpu.memref_squeeze %62 : memref<1x!tpu.dma_semaphore, #tpu.memory_space<semaphore_mem>> -> memref<!tpu.dma_semaphore, #tpu.memory_space<semaphore_mem>>
    tpu.wait_dma2 semaphore(%63 : memref<!tpu.dma_semaphore, #tpu.memory_space<semaphore_mem>>) src(%60 : memref<1x128xf32, #tpu.memory_space<any>>) dst(%61 : memref<1x128xf32, #tpu.memory_space<vmem>>)
    %c6_i32_48 = arith.constant 6 : i32
    %c0_i32_49 = arith.constant 0 : i32
    %64 = tpu.memref_slice %arg2[%30, %c0_i32_49] : memref<256x128xf32, #tpu.memory_space<any>> -> memref<1x128xf32, #tpu.memory_space<any>>
    %c6_i32_50 = arith.constant 6 : i32
    %c0_i32_51 = arith.constant 0 : i32
    %65 = tpu.memref_slice %arg10[%c6_i32_50, %c0_i32_51] : memref<8x128xf32, #tpu.memory_space<vmem>> -> memref<1x128xf32, #tpu.memory_space<vmem>>
    %66 = tpu.memref_slice %arg11[%c6_i32_48] : memref<8x!tpu.dma_semaphore, #tpu.memory_space<semaphore_mem>> -> memref<1x!tpu.dma_semaphore, #tpu.memory_space<semaphore_mem>>
    %67 = tpu.memref_squeeze %66 : memref<1x!tpu.dma_semaphore, #tpu.memory_space<semaphore_mem>> -> memref<!tpu.dma_semaphore, #tpu.memory_space<semaphore_mem>>
    tpu.wait_dma2 semaphore(%67 : memref<!tpu.dma_semaphore, #tpu.memory_space<semaphore_mem>>) src(%64 : memref<1x128xf32, #tpu.memory_space<any>>) dst(%65 : memref<1x128xf32, #tpu.memory_space<vmem>>)
    %c7_i32_52 = arith.constant 7 : i32
    %c0_i32_53 = arith.constant 0 : i32
    %68 = tpu.memref_slice %arg2[%35, %c0_i32_53] : memref<256x128xf32, #tpu.memory_space<any>> -> memref<1x128xf32, #tpu.memory_space<any>>
    %c7_i32_54 = arith.constant 7 : i32
    %c0_i32_55 = arith.constant 0 : i32
    %69 = tpu.memref_slice %arg10[%c7_i32_54, %c0_i32_55] : memref<8x128xf32, #tpu.memory_space<vmem>> -> memref<1x128xf32, #tpu.memory_space<vmem>>
    %70 = tpu.memref_slice %arg11[%c7_i32_52] : memref<8x!tpu.dma_semaphore, #tpu.memory_space<semaphore_mem>> -> memref<1x!tpu.dma_semaphore, #tpu.memory_space<semaphore_mem>>
    %71 = tpu.memref_squeeze %70 : memref<1x!tpu.dma_semaphore, #tpu.memory_space<semaphore_mem>> -> memref<!tpu.dma_semaphore, #tpu.memory_space<semaphore_mem>>
    tpu.wait_dma2 semaphore(%71 : memref<!tpu.dma_semaphore, #tpu.memory_space<semaphore_mem>>) src(%68 : memref<1x128xf32, #tpu.memory_space<any>>) dst(%69 : memref<1x128xf32, #tpu.memory_space<vmem>>)
    %c0_56 = arith.constant 0 : index
    %c0_57 = arith.constant 0 : index
    %72 = vector.load %arg10[%c0_56, %c0_57] : memref<8x128xf32, #tpu.memory_space<vmem>>, vector<8x128xf32>
    %73 = arith.truncf %72 : vector<8x128xf32> to vector<8x128xbf16>
    %c0_58 = arith.constant 0 : index
    %c0_59 = arith.constant 0 : index
    %74 = vector.load %arg3[%c0_58, %c0_59] : memref<128x512xbf16, #tpu.memory_space<vmem>>, vector<128x512xbf16>
    %cst = arith.constant dense<0.000000e+00> : vector<8x512xf32>
    %75 = tpu.matmul %73, %74, %cst {dimension_numbers = #tpu.dot_dimension_numbers<[1], [0], [0], [1], [0, 0, 1, 1], [], []>} : vector<8x128xbf16>, vector<128x512xbf16>, vector<8x512xf32> -> vector<8x512xf32>
    %c0_60 = arith.constant 0 : index
    %c0_61 = arith.constant 0 : index
    %76 = vector.load %arg4[%c0_60, %c0_61] : memref<1x512xf32, #tpu.memory_space<vmem>>, vector<1x512xf32>
    %77 = vector.broadcast %76 : vector<1x512xf32> to vector<8x512xf32>
    %78 = arith.addf %75, %77 : vector<8x512xf32>
    %79 = vector.extract_strided_slice %78 {offsets = [0, 0], sizes = [8, 128], strides = [1, 1]} : vector<8x512xf32> to vector<8x128xf32>
    %80 = arith.negf %79 : vector<8x128xf32>
    %81 = math.exp %80 : vector<8x128xf32>
    %cst_62 = arith.constant 1.000000e+00 : f32
    %82 = vector.broadcast %cst_62 : f32 to vector<8x128xf32>
    %83 = arith.addf %82, %81 : vector<8x128xf32>
    %84 = arith.divf %82, %83 : vector<8x128xf32>
    %85 = vector.extract_strided_slice %78 {offsets = [0, 256], sizes = [8, 128], strides = [1, 1]} : vector<8x512xf32> to vector<8x128xf32>
    %86 = math.tanh %85 : vector<8x128xf32>
    %87 = vector.extract_strided_slice %78 {offsets = [0, 384], sizes = [8, 128], strides = [1, 1]} : vector<8x512xf32> to vector<8x128xf32>
    %88 = arith.negf %87 : vector<8x128xf32>
    %89 = math.exp %88 : vector<8x128xf32>
    %cst_63 = arith.constant 1.000000e+00 : f32
    %90 = vector.broadcast %cst_63 : f32 to vector<8x128xf32>
    %91 = arith.addf %90, %89 : vector<8x128xf32>
    %92 = arith.divf %90, %91 : vector<8x128xf32>
    %93 = arith.mulf %84, %86 : vector<8x128xf32>
    %94 = math.tanh %93 : vector<8x128xf32>
    %95 = arith.mulf %92, %94 : vector<8x128xf32>
    %c0_64 = arith.constant 0 : index
    %c0_65 = arith.constant 0 : index
    %96 = vector.load %arg8[%c0_64, %c0_65] : memref<8x128xf32, #tpu.memory_space<vmem>>, vector<8x128xf32>
    tpu.vector_store %arg8[%c0_64, %c0_65], %95 {strides = array<i32>} : memref<8x128xf32, #tpu.memory_space<vmem>>, vector<8x128xf32>,
    %c0_66 = arith.constant 0 : index
    %c0_67 = arith.constant 0 : index
    %97 = vector.load %arg9[%c0_66, %c0_67] : memref<8x128xf32, #tpu.memory_space<vmem>>, vector<8x128xf32>
    tpu.vector_store %arg9[%c0_66, %c0_67], %93 {strides = array<i32>} : memref<8x128xf32, #tpu.memory_space<vmem>>, vector<8x128xf32>,
    %98 = arith.truncf %95 : vector<8x128xf32> to vector<8x128xbf16>
    %c0_68 = arith.constant 0 : index
    %c0_69 = arith.constant 0 : index
    %99 = vector.load %arg5[%c0_68, %c0_69] : memref<128x256xbf16, #tpu.memory_space<vmem>>, vector<128x256xbf16>
    %cst_70 = arith.constant dense<0.000000e+00> : vector<8x256xf32>
    %100 = tpu.matmul %98, %99, %cst_70 {dimension_numbers = #tpu.dot_dimension_numbers<[1], [0], [0], [1], [0, 0, 1, 1], [], []>} : vector<8x128xbf16>, vector<128x256xbf16>, vector<8x256xf32> -> vector<8x256xf32>
    %c0_71 = arith.constant 0 : index
    %c0_72 = arith.constant 0 : index
    %101 = vector.load %arg6[%c0_71, %c0_72] : memref<1x256xf32, #tpu.memory_space<vmem>>, vector<1x256xf32>
    %102 = vector.broadcast %101 : vector<1x256xf32> to vector<8x256xf32>
    %103 = arith.addf %100, %102 : vector<8x256xf32>
    %cst_73 = arith.constant dense<0xFF800000> : vector<8xf32>
    %104 = vector.multi_reduction <maximumf>, %103, %cst_73 [1] : vector<8x256xf32> to vector<8xf32>
    %105 = vector.shape_cast %104 : vector<8xf32> to vector<8x1xf32>
    %106 = vector.broadcast %105 : vector<8x1xf32> to vector<8x256xf32>
    %107 = arith.subf %103, %106 : vector<8x256xf32>
    %108 = math.exp %107 : vector<8x256xf32>
    %cst_74 = arith.constant dense<0.000000e+00> : vector<8xf32>
    %109 = vector.multi_reduction <add>, %108, %cst_74 [1] : vector<8x256xf32> to vector<8xf32>
    %110 = vector.shape_cast %109 : vector<8xf32> to vector<8x1xf32>
    %111 = math.log %110 : vector<8x1xf32>
    %112 = vector.broadcast %111 : vector<8x1xf32> to vector<8x256xf32>
    %113 = arith.subf %107, %112 : vector<8x256xf32>
    %c0_75 = arith.constant 0 : index
    %c0_76 = arith.constant 0 : index
    %114 = vector.load %arg7[%c0_75, %c0_76] : memref<8x256xf32, #tpu.memory_space<vmem>>, vector<8x256xf32>
    tpu.vector_store %arg7[%c0_75, %c0_76], %113 {strides = array<i32>} : memref<8x256xf32, #tpu.memory_space<vmem>>, vector<8x256xf32>,
    return
  }
  func.func @transform_1(%arg0: i32, %arg1: memref<8xi32, #tpu.memory_space<smem>>) -> (i32, i32) {
    %c0_i32 = arith.constant 0 : i32
    %c0_i32_0 = arith.constant 0 : i32
    %c0_i32_1 = arith.constant 0 : i32
    return %c0_i32, %c0_i32_0 : i32, i32
  }
  func.func @transform_2(%arg0: i32, %arg1: memref<8xi32, #tpu.memory_space<smem>>) -> (i32, i32) {
    %c0_i32 = arith.constant 0 : i32
    %c0_i32_0 = arith.constant 0 : i32
    %c0_i32_1 = arith.constant 0 : i32
    return %c0_i32, %c0_i32_0 : i32, i32
  }
  func.func @transform_3(%arg0: i32, %arg1: memref<8xi32, #tpu.memory_space<smem>>) -> (i32, i32) {
    %c0_i32 = arith.constant 0 : i32
    %c0_i32_0 = arith.constant 0 : i32
    %c0_i32_1 = arith.constant 0 : i32
    return %c0_i32, %c0_i32_0 : i32, i32
  }
  func.func @transform_4(%arg0: i32, %arg1: memref<8xi32, #tpu.memory_space<smem>>) -> (i32, i32) {
    %c0_i32 = arith.constant 0 : i32
    %c0_i32_0 = arith.constant 0 : i32
    %c0_i32_1 = arith.constant 0 : i32
    return %c0_i32, %c0_i32_0 : i32, i32
  }
  func.func @transform_5(%arg0: i32, %arg1: memref<8xi32, #tpu.memory_space<smem>>) -> (i32, i32) {
    %c0_i32 = arith.constant 0 : i32
    %c0_i32_0 = arith.constant 0 : i32
    %c0_i32_1 = arith.constant 0 : i32
    return %c0_i32, %c0_i32_0 : i32, i32
  }
  func.func @transform_6(%arg0: i32, %arg1: memref<8xi32, #tpu.memory_space<smem>>) -> (i32, i32) {
    %c0_i32 = arith.constant 0 : i32
    %c0_i32_0 = arith.constant 0 : i32
    %c0_i32_1 = arith.constant 0 : i32
    return %c0_i32, %c0_i32_0 : i32, i32
  }
  func.func @transform_7(%arg0: i32, %arg1: memref<8xi32, #tpu.memory_space<smem>>) -> (i32, i32) {
    %c0_i32 = arith.constant 0 : i32
    %c0_i32_0 = arith.constant 0 : i32
    %c0_i32_1 = arith.constant 0 : i32
    return %c0_i32, %c0_i32_0 : i32, i32
  }
}

</mosaic_0001>

<llo_original>
// kernel: tpu_custom_call.1
$region0: #{tpu_custom_call.1}
  #allocation0 [shape = 'u32[]', space=smem, size = 0x4, offset = 0x4, fixed_abs, tag = 'smem constant byte address 0x4 - core index']
  #allocation1 [shape = 'u32[72,128]{1,0:T(1,128)}', space=vmem, size = 0x9000, scoped, tag = 'internal scratch']
  #allocation2 [shape = 'f32[8,128]{1,0:T(8,128)}', space=vmem, size = 0x1000, scoped, tag = 'scratch operand']
  #allocation3 [shape = 's32[8]{0}', space=sflag, size = 0x20, scoped, tag = 'scratch operand']
  #allocation4 [shape = 's32[1]{0}', space=sflag, size = 0x4, scoped, tag = 'scoped memory for tpu_custom_call.1']
  #allocation5 [shape = 'u8[512]{0}', space=smem, size = 0x200, scoped, tag = 'prefetched SMEM operand 0']
  #allocation16 [shape = 's32[]', space=sflag, size = 0x4, offset = 0, fixed_abs, tag = 'sflag constant byte address 0x0 - dummy sync flag']
  #allocation17 [shape = 's32[]', space=sflag, size = 0x4, offset = 0, fixed_abs, tag = 'sflag constant byte address 0x0 - dummy sync flag']
  #allocation18 [shape = 'u32[]', space=smem, size = 0x4, offset = 0x44, fixed_abs, tag = 'smem constant byte address 0x44 - assertion arg 0']
  #allocation19 [shape = 'u32[]', space=smem, size = 0x4, offset = 0x48, fixed_abs, tag = 'smem constant byte address 0x48 - assertion arg 1']
  #allocation20 [shape = 's32[]', space=sflag, size = 0x4, offset = 0, fixed_abs, tag = 'sflag constant byte address 0x0 - dummy sync flag']
  #allocation21 [shape = 's32[]', space=sflag, size = 0x4, offset = 0, fixed_abs, tag = 'sflag constant byte address 0x0 - dummy sync flag']
  #allocation22 [shape = 's32[]', space=sflag, size = 0x4, offset = 0, fixed_abs, tag = 'sflag constant byte address 0x0 - dummy sync flag']
  #allocation23 [shape = 's32[]', space=sflag, size = 0x4, offset = 0, fixed_abs, tag = 'sflag constant byte address 0x0 - dummy sync flag']
  #allocation24 [shape = 's32[]', space=sflag, size = 0x4, offset = 0, fixed_abs, tag = 'sflag constant byte address 0x0 - dummy sync flag']
  #allocation25 [shape = 's32[]', space=sflag, size = 0x4, offset = 0, fixed_abs, tag = 'sflag constant byte address 0x0 - dummy sync flag']
  #allocation26 [shape = 's32[]', space=sflag, size = 0x4, offset = 0, fixed_abs, tag = 'sflag constant byte address 0x0 - dummy sync flag']
  #allocation27 [shape = 's32[]', space=sflag, size = 0x4, offset = 0, fixed_abs, tag = 'sflag constant byte address 0x0 - dummy sync flag']
  #allocation28 [shape = 's32[]', space=sflag, size = 0x4, offset = 0, fixed_abs, tag = 'sflag constant byte address 0x0 - dummy sync flag']
  #allocation29 [shape = 's32[]', space=sflag, size = 0x4, offset = 0, fixed_abs, tag = 'sflag constant byte address 0x0 - dummy sync flag']
  #allocation30 [shape = 's32[]', space=sflag, size = 0x4, offset = 0, fixed_abs, tag = 'sflag constant byte address 0x0 - dummy sync flag']
  #allocation31 [shape = 's32[]', space=sflag, size = 0x4, offset = 0, fixed_abs, tag = 'sflag constant byte address 0x0 - dummy sync flag']
  #allocation32 [shape = 's32[]', space=sflag, size = 0x4, offset = 0, fixed_abs, tag = 'sflag constant byte address 0x0 - dummy sync flag']
  #allocation33 [shape = 's32[]', space=sflag, size = 0x4, offset = 0, fixed_abs, tag = 'sflag constant byte address 0x0 - dummy sync flag']
  %s0 = inlined_call_operand.hbm [shape: s32[8], index: 0, kind: input, shape index: {}]
  %s1 = inlined_call_operand.hbm [shape: f32[256,128], index: 1, kind: input, shape index: {}]
  %s2 = inlined_call_operand.hbm [shape: bf16[128,512], index: 2, kind: input, shape index: {}]
  %s3 = inlined_call_operand.hbm [shape: f32[1,512], index: 3, kind: input, shape index: {}]
  %s4 = inlined_call_operand.hbm [shape: bf16[128,256], index: 4, kind: input, shape index: {}]
  %s5 = inlined_call_operand.vmem [shape: f32[1,256], index: 5, kind: input, shape index: {}]
  %s6 = inlined_call_operand.hbm [shape: f32[8,256], index: 6, kind: output, shape index: {0}]
  %s7 = inlined_call_operand.hbm [shape: f32[8,128], index: 7, kind: output, shape index: {1}]
  %s8 = inlined_call_operand.hbm [shape: f32[8,128], index: 8, kind: output, shape index: {2}]
  %9 = xla_tuple %s6, %s7, %s8
  %s10 = sld [smem:[#allocation0]]
  $region86: #{tpu_custom_call.1} parent=0
    _
  %s12 = ssub.s32 1, %s10
  %s13 = scalar_select 0, %s12, %s10
  %s15 = sshll.u32 %s0, 4
  %s16 = int_to_ptr.hbm [resolvable:$true] %s15
  %18 = dma.hbm_to_smem %s16, 16, [#allocation5], [#allocation4]
  %20 = dma.done [#allocation4], 16
  %21 = sfence
  $region1: #{tpu_custom_call.1} parent=0
    #allocation6 [shape = 'u8[131072]{0}', space=vmem, size = 0x20000, scoped, tag = 'input window, operand 2, single buffered']
    #allocation7 [shape = 's32[1]{0}', space=sflag, size = 0x4, scoped, tag = 'scoped memory for tpu_custom_call.1']
    #allocation8 [shape = 's32[1]{0}', space=sflag, size = 0x4, scoped, tag = 'scoped memory for tpu_custom_call.1']
    #allocation9 [shape = 'u8[2048]{0}', space=vmem, size = 0x800, scoped, tag = 'input window, operand 3, single buffered']
    #allocation10 [shape = 's32[1]{0}', space=sflag, size = 0x4, scoped, tag = 'scoped memory for tpu_custom_call.1']
    #allocation11 [shape = 'u8[65536]{0}', space=vmem, size = 0x10000, scoped, tag = 'input window, operand 4, single buffered']
    #allocation12 [shape = 'u8[8192]{0}', space=vmem, size = 0x2000, scoped, tag = 'output window, operand 0, single buffered']
    #allocation13 [shape = 'u8[4096]{0}', space=vmem, size = 0x1000, scoped, tag = 'output window, operand 1, single buffered']
    #allocation14 [shape = 's32[1]{0}', space=sflag, size = 0x4, scoped, tag = 'scoped memory for tpu_custom_call.1']
    #allocation15 [shape = 'u8[4096]{0}', space=vmem, size = 0x1000, scoped, tag = 'output window, operand 2, single buffered']
    %22 = vsyncpa [#allocation7], 0
    %23 = vsyncpa [#allocation10], 0
    %24 = vsyncpa [#allocation8], 0
    %25 = vsyncpa [#allocation14], 0
    // Predicated region
    $region2: #{tpu_custom_call.1} parent=1 // pred_check
      _
    $region3: #{tpu_custom_call.1} parent=1 // pred_check_branch
      %27 = sbr.rel (0) target = $region5
    $region4: #{tpu_custom_call.1} parent=1 // pred_region
      %29 = vsyncadd [#allocation7], 0
      %s30 = sshll.u32 %s2, 4
      %s31 = int_to_ptr.hbm [resolvable:$true] %s30
      %s32 = sshll.u32 [#allocation6], 4
      %s33 = int_to_ptr.vmem [resolvable:$true] %s32
      %38 = dma.hbm_to_vmem [thread:$0]  %s31, 4096, %s33, [#allocation7], 256, 256, 16
    $region5: #{tpu_custom_call.1} parent=1 // pred_fallthru
      _
    // Predicated region
    $region6: #{tpu_custom_call.1} parent=1 // pred_check
      _
    $region7: #{tpu_custom_call.1} parent=1 // pred_check_branch
      %40 = sbr.rel (0) target = $region9
    $region8: #{tpu_custom_call.1} parent=1 // pred_region
      %42 = vsyncadd [#allocation10], 0
      %s44 = sshll.u32 %s3, 4
      %s45 = int_to_ptr.hbm [resolvable:$true] %s44
      %s46 = sshll.u32 [#allocation9], 4
      %s47 = int_to_ptr.vmem [resolvable:$true] %s46
      %49 = dma.hbm_to_vmem [thread:$0]  %s45, 64, %s47, [#allocation10]
    $region9: #{tpu_custom_call.1} parent=1 // pred_fallthru
      _
    // Predicated region
    $region10: #{tpu_custom_call.1} parent=1 // pred_check
      _
    $region11: #{tpu_custom_call.1} parent=1 // pred_check_branch
      %51 = sbr.rel (0) target = $region13
    $region12: #{tpu_custom_call.1} parent=1 // pred_region
      %53 = vsyncadd [#allocation10], 0
      %s54 = sshll.u32 %s4, 4
      %s55 = int_to_ptr.hbm [resolvable:$true] %s54
      %s56 = sshll.u32 [#allocation11], 4
      %s57 = int_to_ptr.vmem [resolvable:$true] %s56
      %62 = dma.hbm_to_vmem [thread:$0]  %s55, 2048, %s57, [#allocation10], 128, 128, 8
    $region13: #{tpu_custom_call.1} parent=1 // pred_fallthru
      _
    // Predicated region
    $region14: #{tpu_custom_call.1} parent=1 // pred_check
      _
    $region15: #{tpu_custom_call.1} parent=1 // pred_check_branch
      %64 = sbr.rel (0) target = $region17
    $region16: #{tpu_custom_call.1} parent=1 // pred_region
      _
    $region17: #{tpu_custom_call.1} parent=1 // pred_fallthru
      _
    // Predicated region
    $region18: #{tpu_custom_call.1} parent=1 // pred_check
      _
    $region19: #{tpu_custom_call.1} parent=1 // pred_check_branch
      %66 = sbr.rel (0) target = $region21
    $region20: #{tpu_custom_call.1} parent=1 // pred_region
      %68 = dma.done [#allocation7], 4096
    $region21: #{tpu_custom_call.1} parent=1 // pred_fallthru
      _
    // Predicated region
    $region22: #{tpu_custom_call.1} parent=1 // pred_check
      _
    $region23: #{tpu_custom_call.1} parent=1 // pred_check_branch
      %70 = sbr.rel (0) target = $region25
    $region24: #{tpu_custom_call.1} parent=1 // pred_region
      %72 = dma.done [#allocation10], 64
    $region25: #{tpu_custom_call.1} parent=1 // pred_fallthru
      _
    // Predicated region
    $region26: #{tpu_custom_call.1} parent=1 // pred_check
      _
    $region27: #{tpu_custom_call.1} parent=1 // pred_check_branch
      %74 = sbr.rel (0) target = $region29
    $region28: #{tpu_custom_call.1} parent=1 // pred_region
      %76 = dma.done [#allocation10], 2048
    $region29: #{tpu_custom_call.1} parent=1 // pred_fallthru
      _
    %s77 = sld [smem:[#allocation5]]
    %s78 = scalar_lea.hbm %s1, %s77
    // Predicated region
    $region30: #{tpu_custom_call.1} parent=1 // pred_check
      _
    $region31: #{tpu_custom_call.1} parent=1 // pred_check_branch
      %80 = sbr.rel target = $region33
    $region32: #{tpu_custom_call.1} parent=1 // pred_region
      %81 = sst [smem:[#allocation18]] [#allocation17]
      %82 = sst [smem:[#allocation19]] [#allocation16]
    $region33: #{tpu_custom_call.1} parent=1 // pred_fallthru
      _
    %84 = shalt.err (0)
    %s86 = sshll.u32 %s78, 4
    %s87 = int_to_ptr.hbm [resolvable:$true] %s86
    %s88 = sshll.u32 [#allocation2], 4
    %s89 = int_to_ptr.vmem [resolvable:$true] %s88
    %91 = dma.hbm_to_vmem [thread:$0]  %s87, 16, %s89, [#allocation3]
    %s92 = sld [smem:[#allocation5 + $0x1]]
    %s93 = scalar_lea.hbm %s1, %s92
    %s94 = scalar_lea.vmem [#allocation2], 1
    %s95 = scalar_lea.sflag [#allocation3], 1
    // Predicated region
    $region34: #{tpu_custom_call.1} parent=1 // pred_check
      _
    $region35: #{tpu_custom_call.1} parent=1 // pred_check_branch
      %97 = sbr.rel target = $region37
    $region36: #{tpu_custom_call.1} parent=1 // pred_region
      %98 = sst [smem:[#allocation18]] [#allocation21]
      %99 = sst [smem:[#allocation19]] [#allocation20]
    $region37: #{tpu_custom_call.1} parent=1 // pred_fallthru
      _
    %101 = shalt.err (0)
    %s103 = sshll.u32 %s93, 4
    %s104 = int_to_ptr.hbm [resolvable:$true] %s103
    %s105 = sshll.u32 %s94, 4
    %s106 = int_to_ptr.vmem [resolvable:$true] %s105
    %108 = dma.hbm_to_vmem [thread:$0]  %s104, 16, %s106, %s95
    %s109 = sld [smem:[#allocation5 + $0x2]]
    %s110 = scalar_lea.hbm %s1, %s109
    %s111 = scalar_lea.vmem [#allocation2], 2
    %s112 = scalar_lea.sflag [#allocation3], 2
    // Predicated region
    $region38: #{tpu_custom_call.1} parent=1 // pred_check
      _
    $region39: #{tpu_custom_call.1} parent=1 // pred_check_branch
      %114 = sbr.rel target = $region41
    $region40: #{tpu_custom_call.1} parent=1 // pred_region
      %115 = sst [smem:[#allocation18]] [#allocation23]
      %116 = sst [smem:[#allocation19]] [#allocation22]
    $region41: #{tpu_custom_call.1} parent=1 // pred_fallthru
      _
    %118 = shalt.err (0)
    %s120 = sshll.u32 %s110, 4
    %s121 = int_to_ptr.hbm [resolvable:$true] %s120
    %s122 = sshll.u32 %s111, 4
    %s123 = int_to_ptr.vmem [resolvable:$true] %s122
    %125 = dma.hbm_to_vmem [thread:$0]  %s121, 16, %s123, %s112
    %s126 = sld [smem:[#allocation5 + $0x3]]
    %s127 = scalar_lea.hbm %s1, %s126
    %s128 = scalar_lea.vmem [#allocation2], 3
    %s129 = scalar_lea.sflag [#allocation3], 3
    // Predicated region
    $region42: #{tpu_custom_call.1} parent=1 // pred_check
      _
    $region43: #{tpu_custom_call.1} parent=1 // pred_check_branch
      %131 = sbr.rel target = $region45
    $region44: #{tpu_custom_call.1} parent=1 // pred_region
      %132 = sst [smem:[#allocation18]] [#allocation25]
      %133 = sst [smem:[#allocation19]] [#allocation24]
    $region45: #{tpu_custom_call.1} parent=1 // pred_fallthru
      _
    %135 = shalt.err (0)
    %s137 = sshll.u32 %s127, 4
    %s138 = int_to_ptr.hbm [resolvable:$true] %s137
    %s139 = sshll.u32 %s128, 4
    %s140 = int_to_ptr.vmem [resolvable:$true] %s139
    %142 = dma.hbm_to_vmem [thread:$0]  %s138, 16, %s140, %s129
    %s143 = sld [smem:[#allocation5 + $0x4]]
    %s144 = scalar_lea.hbm %s1, %s143
    %s145 = scalar_lea.vmem [#allocation2], 4
    %s146 = scalar_lea.sflag [#allocation3], 4
    // Predicated region
    $region46: #{tpu_custom_call.1} parent=1 // pred_check
      _
    $region47: #{tpu_custom_call.1} parent=1 // pred_check_branch
      %148 = sbr.rel target = $region49
    $region48: #{tpu_custom_call.1} parent=1 // pred_region
      %149 = sst [smem:[#allocation18]] [#allocation27]
      %150 = sst [smem:[#allocation19]] [#allocation26]
    $region49: #{tpu_custom_call.1} parent=1 // pred_fallthru
      _
    %152 = shalt.err (0)
    %s154 = sshll.u32 %s144, 4
    %s155 = int_to_ptr.hbm [resolvable:$true] %s154
    %s156 = sshll.u32 %s145, 4
    %s157 = int_to_ptr.vmem [resolvable:$true] %s156
    %159 = dma.hbm_to_vmem [thread:$0]  %s155, 16, %s157, %s146
    %s160 = sld [smem:[#allocation5 + $0x5]]
    %s161 = scalar_lea.hbm %s1, %s160
    %s162 = scalar_lea.vmem [#allocation2], 5
    %s163 = scalar_lea.sflag [#allocation3], 5
    // Predicated region
    $region50: #{tpu_custom_call.1} parent=1 // pred_check
      _
    $region51: #{tpu_custom_call.1} parent=1 // pred_check_branch
      %165 = sbr.rel target = $region53
    $region52: #{tpu_custom_call.1} parent=1 // pred_region
      %166 = sst [smem:[#allocation18]] [#allocation29]
      %167 = sst [smem:[#allocation19]] [#allocation28]
    $region53: #{tpu_custom_call.1} parent=1 // pred_fallthru
      _
    %169 = shalt.err (0)
    %s171 = sshll.u32 %s161, 4
    %s172 = int_to_ptr.hbm [resolvable:$true] %s171
    %s173 = sshll.u32 %s162, 4
    %s174 = int_to_ptr.vmem [resolvable:$true] %s173
    %176 = dma.hbm_to_vmem [thread:$0]  %s172, 16, %s174, %s163
    %s177 = sld [smem:[#allocation5 + $0x6]]
    %s178 = scalar_lea.hbm %s1, %s177
    %s179 = scalar_lea.vmem [#allocation2], 6
    %s180 = scalar_lea.sflag [#allocation3], 6
    // Predicated region
    $region54: #{tpu_custom_call.1} parent=1 // pred_check
      _
    $region55: #{tpu_custom_call.1} parent=1 // pred_check_branch
      %182 = sbr.rel target = $region57
    $region56: #{tpu_custom_call.1} parent=1 // pred_region
      %183 = sst [smem:[#allocation18]] [#allocation31]
      %184 = sst [smem:[#allocation19]] [#allocation30]
    $region57: #{tpu_custom_call.1} parent=1 // pred_fallthru
      _
    %186 = shalt.err (0)
    %s188 = sshll.u32 %s178, 4
    %s189 = int_to_ptr.hbm [resolvable:$true] %s188
    %s190 = sshll.u32 %s179, 4
    %s191 = int_to_ptr.vmem [resolvable:$true] %s190
    %193 = dma.hbm_to_vmem [thread:$0]  %s189, 16, %s191, %s180
    %s194 = sld [smem:[#allocation5 + $0x7]]
    %s195 = scalar_lea.hbm %s1, %s194
    %s196 = scalar_lea.vmem [#allocation2], 7
    %s197 = scalar_lea.sflag [#allocation3], 7
    // Predicated region
    $region58: #{tpu_custom_call.1} parent=1 // pred_check
      _
    $region59: #{tpu_custom_call.1} parent=1 // pred_check_branch
      %199 = sbr.rel target = $region61
    $region60: #{tpu_custom_call.1} parent=1 // pred_region
      %200 = sst [smem:[#allocation18]] [#allocation33]
      %201 = sst [smem:[#allocation19]] [#allocation32]
    $region61: #{tpu_custom_call.1} parent=1 // pred_fallthru
      _
    %203 = shalt.err (0)
    %s205 = sshll.u32 %s195, 4
    %s206 = int_to_ptr.hbm [resolvable:$true] %s205
    %s207 = sshll.u32 %s196, 4
    %s208 = int_to_ptr.vmem [resolvable:$true] %s207
    %210 = dma.hbm_to_vmem [thread:$0]  %s206, 16, %s208, %s197
    %s211 = smul.u32 1, 1
    %s212 = sshll.u32 %s211, 4
    %213 = dma.done [#allocation3], %s212
    %s214 = sshll.u32 %s211, 4
    %215 = dma.done %s95, %s214
    %s216 = sshll.u32 %s211, 4
    %217 = dma.done %s112, %s216
    %s218 = sshll.u32 %s211, 4
    %219 = dma.done %s129, %s218
    %s220 = sshll.u32 %s211, 4
    %221 = dma.done %s146, %s220
    %s222 = sshll.u32 %s211, 4
    %223 = dma.done %s163, %s222
    %s224 = sshll.u32 %s211, 4
    %225 = dma.done %s180, %s224
    %s226 = sshll.u32 %s211, 4
    %227 = dma.done %s197, %s226
    %v228 = vld [vmem:[#allocation2] sm:$0xff]
    %v229 = vpack.c.bf16 %v228, %v228
    %v230 = vld [vmem:[#allocation6] sm:$0xff]
    %v231 = vld [vmem:[#allocation6 + $0x8] sm:$0xff]
    %v232 = vld [vmem:[#allocation6 + $0x10] sm:$0xff]
    %v233 = vld [vmem:[#allocation6 + $0x18] sm:$0xff]
    %v234 = vld [vmem:[#allocation6 + $0x20] sm:$0xff]
    %v235 = vld [vmem:[#allocation6 + $0x28] sm:$0xff]
    %v236 = vld [vmem:[#allocation6 + $0x30] sm:$0xff]
    %v237 = vld [vmem:[#allocation6 + $0x38] sm:$0xff]
    %v238 = vld [vmem:[#allocation6 + $0x40] sm:$0xff]
    %v239 = vld [vmem:[#allocation6 + $0x48] sm:$0xff]
    %v240 = vld [vmem:[#allocation6 + $0x50] sm:$0xff]
    %v241 = vld [vmem:[#allocation6 + $0x58] sm:$0xff]
    %v242 = vld [vmem:[#allocation6 + $0x60] sm:$0xff]
    %v243 = vld [vmem:[#allocation6 + $0x68] sm:$0xff]
    %v244 = vld [vmem:[#allocation6 + $0x70] sm:$0xff]
    %v245 = vld [vmem:[#allocation6 + $0x78] sm:$0xff]
    %v246 = vld [vmem:[#allocation6 + $0x80] sm:$0xff]
    %v247 = vld [vmem:[#allocation6 + $0x88] sm:$0xff]
    %v248 = vld [vmem:[#allocation6 + $0x90] sm:$0xff]
    %v249 = vld [vmem:[#allocation6 + $0x98] sm:$0xff]
    %v250 = vld [vmem:[#allocation6 + $0xa0] sm:$0xff]
    %v251 = vld [vmem:[#allocation6 + $0xa8] sm:$0xff]
    %v252 = vld [vmem:[#allocation6 + $0xb0] sm:$0xff]
    %v253 = vld [vmem:[#allocation6 + $0xb8] sm:$0xff]
    %v254 = vld [vmem:[#allocation6 + $0xc0] sm:$0xff]
    %v255 = vld [vmem:[#allocation6 + $0xc8] sm:$0xff]
    %v256 = vld [vmem:[#allocation6 + $0xd0] sm:$0xff]
    %v257 = vld [vmem:[#allocation6 + $0xd8] sm:$0xff]
    %v258 = vld [vmem:[#allocation6 + $0xe0] sm:$0xff]
    %v259 = vld [vmem:[#allocation6 + $0xe8] sm:$0xff]
    %v260 = vld [vmem:[#allocation6 + $0xf0] sm:$0xff]
    %v261 = vld [vmem:[#allocation6 + $0xf8] sm:$0xff]
    %v262 = vld [vmem:[#allocation9] sm:$0xf]
    %v264 = vperm.slane %v262, 0
    %v265 = vperm.slane %v262, 2
    %v266 = vperm.slane %v262, 3
    %v302 = vunpack.c.l.b16 %v230
    %v303 = vunpack.c.l.b16 %v231
    %v304 = vunpack.c.h.b16 %v231
    %v305 = vunpack.c.l.b16 %v232
    %v306 = vunpack.c.l.b16 %v233
    %v307 = vunpack.c.h.b16 %v233
    %v308 = vunpack.c.l.b16 %v234
    %v309 = vunpack.c.l.b16 %v235
    %v310 = vunpack.c.h.b16 %v235
    %v311 = vunpack.c.l.b16 %v236
    %v312 = vunpack.c.l.b16 %v237
    %v313 = vunpack.c.h.b16 %v237
    %v314 = vunpack.c.l.b16 %v238
    %v315 = vunpack.c.l.b16 %v239
    %v316 = vunpack.c.h.b16 %v239
    %v317 = vunpack.c.l.b16 %v240
    %v318 = vunpack.c.l.b16 %v241
    %v319 = vunpack.c.h.b16 %v241
    %v320 = vunpack.c.l.b16 %v242
    %v321 = vunpack.c.l.b16 %v243
    %v322 = vunpack.c.h.b16 %v243
    %v323 = vunpack.c.l.b16 %v244
    %v324 = vunpack.c.l.b16 %v245
    %v325 = vunpack.c.h.b16 %v245
    %v326 = vunpack.c.l.b16 %v246
    %v327 = vunpack.c.l.b16 %v247
    %v328 = vunpack.c.h.b16 %v247
    %v329 = vunpack.c.l.b16 %v248
    %v330 = vunpack.c.l.b16 %v249
    %v331 = vunpack.c.h.b16 %v249
    %v332 = vunpack.c.l.b16 %v250
    %v333 = vunpack.c.l.b16 %v251
    %v334 = vunpack.c.h.b16 %v251
    %v335 = vunpack.c.l.b16 %v252
    %v336 = vunpack.c.l.b16 %v253
    %v337 = vunpack.c.h.b16 %v253
    %v338 = vunpack.c.l.b16 %v254
    %v339 = vunpack.c.l.b16 %v255
    %v340 = vunpack.c.h.b16 %v255
    %v341 = vunpack.c.l.b16 %v256
    %v342 = vunpack.c.l.b16 %v257
    %v343 = vunpack.c.h.b16 %v257
    %v344 = vunpack.c.l.b16 %v258
    %v345 = vunpack.c.l.b16 %v259
    %v346 = vunpack.c.h.b16 %v259
    %v347 = vunpack.c.l.b16 %v260
    %v348 = vunpack.c.l.b16 %v261
    %v349 = vunpack.c.h.b16 %v261
    %v350 = vpack.c.b16 %v305, %v302
    %v351 = vpack.c.b16 %v306, %v303
    %v352 = vpack.c.b16 %v307, %v304
    %v353 = vpack.c.b16 %v311, %v308
    %v354 = vpack.c.b16 %v312, %v309
    %v355 = vpack.c.b16 %v313, %v310
    %v356 = vpack.c.b16 %v317, %v314
    %v357 = vpack.c.b16 %v318, %v315
    %v358 = vpack.c.b16 %v319, %v316
    %v359 = vpack.c.b16 %v323, %v320
    %v360 = vpack.c.b16 %v324, %v321
    %v361 = vpack.c.b16 %v325, %v322
    %v362 = vpack.c.b16 %v329, %v326
    %v363 = vpack.c.b16 %v330, %v327
    %v364 = vpack.c.b16 %v331, %v328
    %v365 = vpack.c.b16 %v335, %v332
    %v366 = vpack.c.b16 %v336, %v333
    %v367 = vpack.c.b16 %v337, %v334
    %v368 = vpack.c.b16 %v341, %v338
    %v369 = vpack.c.b16 %v342, %v339
    %v370 = vpack.c.b16 %v343, %v340
    %v371 = vpack.c.b16 %v347, %v344
    %v372 = vpack.c.b16 %v348, %v345
    %v373 = vpack.c.b16 %v349, %v346
    %398 = vmatpush.bf16.msra.mxu0 %v371
    %399 = vmatpush.bf16.msra.mxu0 %v368
    %400 = vmatpush.bf16.msra.mxu0 %v365
    %401 = vmatpush.bf16.msra.mxu0 %v362
    %402 = vmatpush.bf16.msra.mxu0 %v359
    %403 = vmatpush.bf16.msra.mxu0 %v356
    %404 = vmatpush.bf16.msra.mxu0 %v353
    %405 = vmatpush.bf16.msra.mxu0 %v350
    %406 = vmatmul.bf16.gmra.mxu0 %v229
    %v407 = vpop.f32.mrf.mxu0
    %v408 = vadd.f32 %v264, %v407
    %v409 = vpop.f32.mrf.mxu0
    %410 = vdwg.mxu0
    %411 = vmatpush.bf16.msra.mxu0 %v372
    %412 = vmatpush.bf16.msra.mxu0 %v369
    %413 = vmatpush.bf16.msra.mxu0 %v366
    %414 = vmatpush.bf16.msra.mxu0 %v363
    %415 = vmatpush.bf16.msra.mxu0 %v360
    %416 = vmatpush.bf16.msra.mxu0 %v357
    %417 = vmatpush.bf16.msra.mxu0 %v354
    %418 = vmatpush.bf16.msra.mxu0 %v351
    %419 = vmatmul.bf16.gmra.mxu0 %v229
    %v420 = vpop.f32.mrf.mxu0
    %v421 = vadd.f32 %v265, %v420
    %v422 = vpop.f32.mrf.mxu0
    %423 = vdwg.mxu0
    %424 = vmatpush.bf16.msra.mxu0 %v373
    %425 = vmatpush.bf16.msra.mxu0 %v370
    %426 = vmatpush.bf16.msra.mxu0 %v367
    %427 = vmatpush.bf16.msra.mxu0 %v364
    %428 = vmatpush.bf16.msra.mxu0 %v361
    %429 = vmatpush.bf16.msra.mxu0 %v358
    %430 = vmatpush.bf16.msra.mxu0 %v355
    %431 = vmatpush.bf16.msra.mxu0 %v352
    %432 = vmatmul.bf16.gmra.mxu0 %v229
    %v433 = vpop.f32.mrf.mxu0
    %v434 = vadd.f32 %v266, %v433
    %v435 = vpop.f32.mrf.mxu0
    %436 = vdwg.mxu0
    %v437 = vxor.u32 %v408, 2147483648
    %v438 = vmul.f32 %v437, 1.442695
    %v439 = vpow.pop %v438
    %v440 = vadd.f32 %v439, 1.0
    %v441 = vrcp.pop %v440
    %v442 = vmul.f32 %v440, %v441
    %v443 = vsub.f32 1.0, %v442
    %v444 = vmul.f32 %v441, %v443
    %v445 = vadd.f32 %v441, %v444
    %vm446 = vweird.f32 %v440
    %vm447 = vweird.f32 %v441
    %vm448 = vmor %vm446, %vm447
    %v449 = vsel %vm448, %v441, %v445
    %v450 = vand.u32 2147483647, %v440
    %vm451 = vcmp.eq.f32.partialorder %v450, 8.507059e+37
    %v452 = vand.u32 %v440, 2147483648
    %v453 = vor.u32 1.1754944e-38, %v452
    %v454 = vsel %vm451, %v453, %v449
    %v455 = vmul.f32 1.0, %v454
    %v456 = vtanh.pop %v421
    %v457 = vxor.u32 %v434, 2147483648
    %v458 = vmul.f32 %v457, 1.442695
    %v459 = vpow.pop %v458
    %v460 = vadd.f32 %v459, 1.0
    %v461 = vrcp.pop %v460
    %v462 = vmul.f32 %v460, %v461
    %v463 = vsub.f32 1.0, %v462
    %v464 = vmul.f32 %v461, %v463
    %v465 = vadd.f32 %v461, %v464
    %vm466 = vweird.f32 %v460
    %vm467 = vweird.f32 %v461
    %vm468 = vmor %vm466, %vm467
    %v469 = vsel %vm468, %v461, %v465
    %v470 = vand.u32 2147483647, %v460
    %vm471 = vcmp.eq.f32.partialorder %v470, 8.507059e+37
    %v472 = vand.u32 %v460, 2147483648
    %v473 = vor.u32 1.1754944e-38, %v472
    %v474 = vsel %vm471, %v473, %v469
    %v475 = vmul.f32 1.0, %v474
    %v476 = vmul.f32 %v455, %v456
    %v477 = vtanh.pop %v476
    %v478 = vmul.f32 %v475, %v477
    %479 = vst [vmem:[#allocation13] sm:$0xff] %v478
    %480 = vst [vmem:[#allocation15] sm:$0xff] %v476
    %v481 = vpack.c.bf16 %v478, %v478
    %v482 = vld [vmem:[#allocation11] sm:$0xff]
    %v483 = vld [vmem:[#allocation11 + $0x8] sm:$0xff]
    %v484 = vld [vmem:[#allocation11 + $0x10] sm:$0xff]
    %v485 = vld [vmem:[#allocation11 + $0x18] sm:$0xff]
    %v486 = vld [vmem:[#allocation11 + $0x20] sm:$0xff]
    %v487 = vld [vmem:[#allocation11 + $0x28] sm:$0xff]
    %v488 = vld [vmem:[#allocation11 + $0x30] sm:$0xff]
    %v489 = vld [vmem:[#allocation11 + $0x38] sm:$0xff]
    %v490 = vld [vmem:[#allocation11 + $0x40] sm:$0xff]
    %v491 = vld [vmem:[#allocation11 + $0x48] sm:$0xff]
    %v492 = vld [vmem:[#allocation11 + $0x50] sm:$0xff]
    %v493 = vld [vmem:[#allocation11 + $0x58] sm:$0xff]
    %v494 = vld [vmem:[#allocation11 + $0x60] sm:$0xff]
    %v495 = vld [vmem:[#allocation11 + $0x68] sm:$0xff]
    %v496 = vld [vmem:[#allocation11 + $0x70] sm:$0xff]
    %v497 = vld [vmem:[#allocation11 + $0x78] sm:$0xff]
    %v498 = vld [vmem:[%s5] sm:$0x3]
    %v500 = vperm.slane %v498, 0
    %v501 = vperm.slane %v498, 1
    %v520 = vunpack.c.l.b16 %v482
    %v521 = vunpack.c.h.b16 %v482
    %v522 = vunpack.c.l.b16 %v483
    %v523 = vunpack.c.h.b16 %v483
    %v524 = vunpack.c.l.b16 %v484
    %v525 = vunpack.c.h.b16 %v484
    %v526 = vunpack.c.l.b16 %v485
    %v527 = vunpack.c.h.b16 %v485
    %v528 = vunpack.c.l.b16 %v486
    %v529 = vunpack.c.h.b16 %v486
    %v530 = vunpack.c.l.b16 %v487
    %v531 = vunpack.c.h.b16 %v487
    %v532 = vunpack.c.l.b16 %v488
    %v533 = vunpack.c.h.b16 %v488
    %v534 = vunpack.c.l.b16 %v489
    %v535 = vunpack.c.h.b16 %v489
    %v536 = vunpack.c.l.b16 %v490
    %v537 = vunpack.c.h.b16 %v490
    %v538 = vunpack.c.l.b16 %v491
    %v539 = vunpack.c.h.b16 %v491
    %v540 = vunpack.c.l.b16 %v492
    %v541 = vunpack.c.h.b16 %v492
    %v542 = vunpack.c.l.b16 %v493
    %v543 = vunpack.c.h.b16 %v493
    %v544 = vunpack.c.l.b16 %v494
    %v545 = vunpack.c.h.b16 %v494
    %v546 = vunpack.c.l.b16 %v495
    %v547 = vunpack.c.h.b16 %v495
    %v548 = vunpack.c.l.b16 %v496
    %v549 = vunpack.c.h.b16 %v496
    %v550 = vunpack.c.l.b16 %v497
    %v551 = vunpack.c.h.b16 %v497
    %v552 = vpack.c.b16 %v522, %v520
    %v553 = vpack.c.b16 %v523, %v521
    %v554 = vpack.c.b16 %v526, %v524
    %v555 = vpack.c.b16 %v527, %v525
    %v556 = vpack.c.b16 %v530, %v528
    %v557 = vpack.c.b16 %v531, %v529
    %v558 = vpack.c.b16 %v534, %v532
    %v559 = vpack.c.b16 %v535, %v533
    %v560 = vpack.c.b16 %v538, %v536
    %v561 = vpack.c.b16 %v539, %v537
    %v562 = vpack.c.b16 %v542, %v540
    %v563 = vpack.c.b16 %v543, %v541
    %v564 = vpack.c.b16 %v546, %v544
    %v565 = vpack.c.b16 %v547, %v545
    %v566 = vpack.c.b16 %v550, %v548
    %v567 = vpack.c.b16 %v551, %v549
    %584 = vmatpush.bf16.msra.mxu0 %v566
    %585 = vmatpush.bf16.msra.mxu0 %v564
    %586 = vmatpush.bf16.msra.mxu0 %v562
    %587 = vmatpush.bf16.msra.mxu0 %v560
    %588 = vmatpush.bf16.msra.mxu0 %v558
    %589 = vmatpush.bf16.msra.mxu0 %v556
    %590 = vmatpush.bf16.msra.mxu0 %v554
    %591 = vmatpush.bf16.msra.mxu0 %v552
    %592 = vmatmul.bf16.gmra.mxu0 %v481
    %v593 = vpop.f32.mrf.mxu0
    %v594 = vadd.f32 %v500, %v593
    %v595 = vpop.f32.mrf.mxu0
    %596 = vdwg.mxu0
    %597 = vmatpush.bf16.msra.mxu0 %v567
    %598 = vmatpush.bf16.msra.mxu0 %v565
    %599 = vmatpush.bf16.msra.mxu0 %v563
    %600 = vmatpush.bf16.msra.mxu0 %v561
    %601 = vmatpush.bf16.msra.mxu0 %v559
    %602 = vmatpush.bf16.msra.mxu0 %v557
    %603 = vmatpush.bf16.msra.mxu0 %v555
    %604 = vmatpush.bf16.msra.mxu0 %v553
    %605 = vmatmul.bf16.gmra.mxu0 %v481
    %v606 = vpop.f32.mrf.mxu0
    %v607 = vadd.f32 %v501, %v606
    %v608 = vpop.f32.mrf.mxu0
    %609 = vdwg.mxu0
    %v610 = vmax.f32 %v594, %v607
    %611 = vmax.xlane.f32.xlu0 %v610
    %v612 = vpop.xlane.xlu0 %611
    %v613 = vsub.f32 %v594, %v612
    %v614 = vsub.f32 %v607, %v612
    %v615 = vmul.f32 %v613, 1.442695
    %v616 = vpow.pop %v615
    %v617 = vmul.f32 %v614, 1.442695
    %v618 = vpow.pop %v617
    %v619 = vadd.f32 %v616, %v618
    %620 = vadd.xlane.f32.xlu0 %v619
    %v621 = vpop.xlane.xlu0 %620
    %v622 = vlog2.pop %v621
    %v623 = vmul.f32 %v622, 0.6931472
    %v624 = vsub.f32 %v613, %v623
    %v625 = vsub.f32 %v614, %v623
    %626 = vst [vmem:[#allocation12] sm:$0xff] %v624
    %627 = vst [vmem:[#allocation12 + $0x8] sm:$0xff] %v625
    // Predicated region
    $region62: #{tpu_custom_call.1} parent=1 // pred_check
      _
    $region63: #{tpu_custom_call.1} parent=1 // pred_check_branch
      %629 = sbr.rel (0) target = $region65
    $region64: #{tpu_custom_call.1} parent=1 // pred_region
      %631 = vsyncadd [#allocation8], 0
      %s633 = sshll.u32 [#allocation12], 4
      %s634 = int_to_ptr.vmem [resolvable:$true] %s633
      %s635 = sshll.u32 %s6, 4
      %s636 = int_to_ptr.hbm [resolvable:$true] %s635
      %638 = dma.vmem_to_hbm [thread:$0]  %s634, 256, %s636, [#allocation8]
    $region65: #{tpu_custom_call.1} parent=1 // pred_fallthru
      _
    // Predicated region
    $region66: #{tpu_custom_call.1} parent=1 // pred_check
      _
    $region67: #{tpu_custom_call.1} parent=1 // pred_check_branch
      %640 = sbr.rel (0) target = $region69
    $region68: #{tpu_custom_call.1} parent=1 // pred_region
      %642 = vsyncadd [#allocation14], 0
      %s644 = sshll.u32 [#allocation13], 4
      %s645 = int_to_ptr.vmem [resolvable:$true] %s644
      %s646 = sshll.u32 %s7, 4
      %s647 = int_to_ptr.hbm [resolvable:$true] %s646
      %649 = dma.vmem_to_hbm [thread:$0]  %s645, 128, %s647, [#allocation14]
    $region69: #{tpu_custom_call.1} parent=1 // pred_fallthru
      _
    // Predicated region
    $region70: #{tpu_custom_call.1} parent=1 // pred_check
      _
    $region71: #{tpu_custom_call.1} parent=1 // pred_check_branch
      %651 = sbr.rel (0) target = $region73
    $region72: #{tpu_custom_call.1} parent=1 // pred_region
      %653 = vsyncadd [#allocation14], 0
      %s655 = sshll.u32 [#allocation15], 4
      %s656 = int_to_ptr.vmem [resolvable:$true] %s655
      %s657 = sshll.u32 %s8, 4
      %s658 = int_to_ptr.hbm [resolvable:$true] %s657
      %660 = dma.vmem_to_hbm [thread:$0]  %s656, 128, %s658, [#allocation14]
    $region73: #{tpu_custom_call.1} parent=1 // pred_fallthru
      _
    // Predicated region
    $region74: #{tpu_custom_call.1} parent=1 // pred_check
      _
    $region75: #{tpu_custom_call.1} parent=1 // pred_check_branch
      %662 = sbr.rel (0) target = $region77
    $region76: #{tpu_custom_call.1} parent=1 // pred_region
      %664 = dma.done [#allocation8], 256
    $region77: #{tpu_custom_call.1} parent=1 // pred_fallthru
      _
    // Predicated region
    $region78: #{tpu_custom_call.1} parent=1 // pred_check
      _
    $region79: #{tpu_custom_call.1} parent=1 // pred_check_branch
      %666 = sbr.rel (0) target = $region81
    $region80: #{tpu_custom_call.1} parent=1 // pred_region
      %668 = dma.done [#allocation14], 128
    $region81: #{tpu_custom_call.1} parent=1 // pred_fallthru
      _
    // Predicated region
    $region82: #{tpu_custom_call.1} parent=1 // pred_check
      _
    $region83: #{tpu_custom_call.1} parent=1 // pred_check_branch
      %670 = sbr.rel (0) target = $region85
    $region84: #{tpu_custom_call.1} parent=1 // pred_region
      %672 = dma.done [#allocation14], 128
    $region85: #{tpu_custom_call.1} parent=1 // pred_fallthru
      _
    %673 = vsyncpa [#allocation7], 1
    %674 = vsyncpa [#allocation10], 1
    %675 = vsyncpa [#allocation8], 1
    %676 = vsyncpa [#allocation14], 1
  %677 = vsyncmov [#allocation3]
  %s678 = vpop.sfrf %677
  %p679 = scmp.eq.s32.totalorder %s678, 0
  %p680 = pneg %p679
  %682 = shalt.err (%p680)
  %s683 = scalar_lea.sflag [#allocation3], 1
  %684 = vsyncmov %s683
  %s685 = vpop.sfrf %684
  %p686 = scmp.eq.s32.totalorder %s685, 0
  %p687 = pneg %p686
  %689 = shalt.err (%p687)
  %s690 = scalar_lea.sflag [#allocation3], 2
  %691 = vsyncmov %s690
  %s692 = vpop.sfrf %691
  %p693 = scmp.eq.s32.totalorder %s692, 0
  %p694 = pneg %p693
  %696 = shalt.err (%p694)
  %s697 = scalar_lea.sflag [#allocation3], 3
  %698 = vsyncmov %s697
  %s699 = vpop.sfrf %698
  %p700 = scmp.eq.s32.totalorder %s699, 0
  %p701 = pneg %p700
  %703 = shalt.err (%p701)
  %s704 = scalar_lea.sflag [#allocation3], 4
  %705 = vsyncmov %s704
  %s706 = vpop.sfrf %705
  %p707 = scmp.eq.s32.totalorder %s706, 0
  %p708 = pneg %p707
  %710 = shalt.err (%p708)
  %s711 = scalar_lea.sflag [#allocation3], 5
  %712 = vsyncmov %s711
  %s713 = vpop.sfrf %712
  %p714 = scmp.eq.s32.totalorder %s713, 0
  %p715 = pneg %p714
  %717 = shalt.err (%p715)
  %s718 = scalar_lea.sflag [#allocation3], 6
  %719 = vsyncmov %s718
  %s720 = vpop.sfrf %719
  %p721 = scmp.eq.s32.totalorder %s720, 0
  %p722 = pneg %p721
  %724 = shalt.err (%p722)
  %s725 = scalar_lea.sflag [#allocation3], 7
  %726 = vsyncmov %s725
  %s727 = vpop.sfrf %726
  %p728 = scmp.eq.s32.totalorder %s727, 0
  %p729 = pneg %p728
  %731 = shalt.err (%p729)

</llo_original>
